<compile_context>
chip_gen: v7x
topology: tpu7x:2x2x1
jax: 0.10.0
libtpu: 0.0.40
codegen_flags: <defaults>
</compile_context>

<pallas_src>
import jax
import jax.numpy as jnp
from jax.experimental import pallas as pl
from jax.experimental.pallas import tpu as pltpu


# ---------------------------------------------------------------------------
# Kernel
# ---------------------------------------------------------------------------
def _hsilu_kernel(x_ref, o_ref):
    # Upcast to f32 for the activation math (matches a PyTorch-in-f32 reference
    # for bf16/fp8 inputs).  Free: the kernel is HBM-bound, not VALU-bound.
    x = x_ref[...].astype(jnp.float32)
    # hardsigmoid(x) = clamp((x + 3) / 6, 0, 1)   (PyTorch semantics)
    hs = jnp.clip((x + 3.0) * (1.0 / 6.0), 0.0, 1.0)
    o_ref[...] = (x * hs).astype(o_ref.dtype)


# ---------------------------------------------------------------------------
# Hardware-aware sizing helpers
# ---------------------------------------------------------------------------
_LANE_CANDIDATES = (1024, 512, 256, 128)
_VMEM_CAP = None


def _round_up(a: int, b: int) -> int:
    return ((a + b - 1) // b) * b


def _vmem_capacity_bytes() -> int:
    """Physical VMEM per core (cached); falls back to 128 MiB if unavailable."""
    global _VMEM_CAP
    if _VMEM_CAP is None:
        cap = 128 * 1024 * 1024
        try:
            info = pltpu.get_tpu_info()
            cap = int(getattr(info, "vmem_capacity_bytes", cap)) or cap
        except Exception:
            pass
        _VMEM_CAP = cap
    return _VMEM_CAP


def _target_block_bytes() -> int:
    # v7x (64 MiB VMEM/TC, ~3.2 TB/s HBM/TC): bigger blocks amortize the
    # ~0.35 us per-grid-step overhead (<10% instead of ~25% at 2 MiB).
    # v5e/v6e (128 MiB VMEM): ~4 MiB tiles already sit at ~86% of the roofline.
    if _vmem_capacity_bytes() <= 64 * 1024 * 1024:
        return 6 * 1024 * 1024
    return 4 * 1024 * 1024


def _hsilu_jnp(x: jax.Array) -> jax.Array:
    """Plain-jnp fallback (tiny tails / tiny tensors), same numerics as kernel."""
    xf = x.astype(jnp.float32)
    return (xf * jnp.clip((xf + 3.0) * (1.0 / 6.0), 0.0, 1.0)).astype(x.dtype)


# ---------------------------------------------------------------------------
# Pallas launcher on a lane-dense 2D slab
# ---------------------------------------------------------------------------
def _hsilu_2d(x2d: jax.Array, block_rows=None) -> jax.Array:
    rows, lanes = x2d.shape
    dtype = x2d.dtype
    itemsize = jnp.dtype(dtype).itemsize
    n = rows * lanes
    row_bytes = lanes * itemsize
    # Sublane granularity scales with dtype packing: 8 (f32), 16 (bf16), 32 (int8/fp8).
    sub_gran = max(8, 32 // max(itemsize, 1))

    auto = block_rows is None
    if auto:
        block_rows = max(sub_gran, _target_block_bytes() // row_bytes)
    block_rows = _round_up(int(block_rows), sub_gran)

    # Clamp so the in+out double-buffered footprint (4 live blocks) stays well
    # inside physical VMEM, even for user-provided block_rows.
    max_block_bytes = _vmem_capacity_bytes() // 8
    max_rows = max(sub_gran, (max_block_bytes // row_bytes) // sub_gran * sub_gran)
    block_rows = min(block_rows, max_rows)

    if block_rows >= rows:
        if auto and rows > 2 * sub_gran:
            # grid=1 would put the whole slab on one TensorCore (half the chip's
            # HBM bandwidth on v7x) -- split into two blocks instead.
            block_rows = _round_up(pl.cdiv(rows, 2), sub_gran)
        else:
            block_rows = rows  # full-extent block is always a legal block shape
    elif auto:
        nb = pl.cdiv(rows, block_rows)
        if nb % 2 == 1 and nb <= 7:
            # A small odd grid leaves up to a full block of megacore imbalance;
            # shrink the block if that makes the block count even.
            cand = _round_up(pl.cdiv(rows, nb + 1), sub_gran)
            if cand >= sub_gran and pl.cdiv(rows, cand) % 2 == 0:
                block_rows = cand

    block_bytes = block_rows * row_bytes
    # Input + output, each double-buffered, plus headroom for Mosaic internals.
    vmem_limit = int(min(_vmem_capacity_bytes(), 4 * block_bytes + (4 << 20)))

    grid = (pl.cdiv(rows, block_rows),)  # last block may be partial (masked write)
    # TODO(synk): if an xprof trace on v7x shows exposed input DMA at block
    # boundaries, add pipeline_mode=pl.Buffered(3) to the input BlockSpec.
    return pl.pallas_call(
        _hsilu_kernel,
        out_shape=jax.ShapeDtypeStruct((rows, lanes), dtype),
        grid=grid,
        in_specs=[pl.BlockSpec((block_rows, lanes), lambda i: (i, 0))],
        out_specs=pl.BlockSpec((block_rows, lanes), lambda i: (i, 0)),
        compiler_params=pltpu.CompilerParams(
            # Row blocks are independent -> megacore-shardable (both TCs on v7x).
            dimension_semantics=("parallel",),
            vmem_limit_bytes=vmem_limit,
        ),
        cost_estimate=pl.CostEstimate(
            # add, mul, max, min, mul per element (approximate; advisory only).
            flops=5 * n, transcendentals=0, bytes_accessed=2 * n * itemsize),
    )(x2d)


# ---------------------------------------------------------------------------
# Public wrapper
# ---------------------------------------------------------------------------
def hsilu(x: jax.Array, *, block_rows=None) -> jax.Array:
    """Elementwise x * hardsigmoid(x) (PyTorch HSiLU). Any shape / dtype."""
    orig_shape = x.shape
    n = x.size
    if n == 0:
        return x

    # Fast path: widest lane count that divides the element count -> no pad,
    # no output slice (reshapes of contiguous data are free).
    lanes = next((c for c in _LANE_CANDIDATES if n % c == 0), None)
    if lanes is not None:
        out2d = _hsilu_2d(jnp.reshape(x, (n // lanes, lanes)), block_rows)
        return jnp.reshape(out2d, orig_shape)

    # Slow path (rare for NCHW tensors): run the kernel on the largest
    # 128-divisible prefix and handle the <128-element tail with plain jnp.
    # (Avoids the full-array pad + slice round trip, which tripled HBM traffic.)
    flat = jnp.reshape(x, (-1,))
    n_main = (n // 128) * 128
    if n_main == 0:
        return jnp.reshape(_hsilu_jnp(flat), orig_shape)  # tiny tensor: pure jnp
    main_out = _hsilu_2d(jnp.reshape(flat[:n_main], (n_main // 128, 128)), block_rows)
    tail_out = _hsilu_jnp(flat[n_main:])
    out_flat = jnp.concatenate([jnp.reshape(main_out, (-1,)), tail_out])
    return jnp.reshape(out_flat, orig_shape)


# ---------------------------------------------------------------------------
# Self-test
# ---------------------------------------------------------------------------
def _hsilu_ref(x):
    return _hsilu_jnp(x)


if __name__ == "__main__":
    key = jax.random.PRNGKey(0)

    # NCHW input, matching the PyTorch module's conv-style convention.
    x = jax.random.normal(key, (2, 4, 16, 16), dtype=jnp.float32) * 4.0
    out = jax.block_until_ready(hsilu(x))
    ref = _hsilu_ref(x)
    assert out.shape == x.shape and out.dtype == x.dtype
    assert jnp.allclose(out, ref, atol=1e-6, rtol=1e-6)

    # bf16 fast path (dtype-aware sublane granularity, f32 math inside kernel).
    xb = x.astype(jnp.bfloat16)
    outb = jax.block_until_ready(hsilu(xb))
    refb = _hsilu_ref(xb)
    assert outb.shape == xb.shape and outb.dtype == jnp.bfloat16
    assert jnp.allclose(outb.astype(jnp.float32), refb.astype(jnp.float32),
                        atol=2e-2, rtol=2e-2)

    # Medium auto-path tensor: exercises the split-into-2-blocks megacore path.
    xs = jax.random.normal(jax.random.PRNGKey(3), (2, 16, 32, 32), dtype=jnp.float32)
    outs = jax.block_until_ready(hsilu(xs))
    assert jnp.allclose(outs, _hsilu_ref(xs), atol=1e-6, rtol=1e-6)

    # Non-128-divisible element count: kernel on the prefix, jnp on the tail.
    xo = jax.random.normal(jax.random.PRNGKey(1), (3, 5, 7, 11), dtype=jnp.float32)
    outo = jax.block_until_ready(hsilu(xo))
    assert jnp.allclose(outo, _hsilu_ref(xo), atol=1e-6, rtol=1e-6)

    # Tiny (<128 elements) tensor: pure-jnp fallback.
    xt = jax.random.normal(jax.random.PRNGKey(4), (3, 5, 7), dtype=jnp.float32)
    outt = jax.block_until_ready(hsilu(xt))
    assert jnp.allclose(outt, _hsilu_ref(xt), atol=1e-6, rtol=1e-6)

    # Multi-block grid with a partial trailing block (masked writes).
    xm = jax.random.normal(jax.random.PRNGKey(2), (2, 4, 40, 64), dtype=jnp.float32)
    outm = jax.block_until_ready(hsilu(xm, block_rows=8))
    assert jnp.allclose(outm, _hsilu_ref(xm), atol=1e-6, rtol=1e-6)

    print("KERNEL_OK")
</pallas_src>

<mosaic_0001>
module attributes {stable_mosaic.version = 11 : i64} {
  func.func @_hsilu_kernel(%arg0: i32, %arg1: memref<2x1024xf32, #tpu.memory_space<vmem>>, %arg2: memref<2x1024xf32, #tpu.memory_space<vmem>>) attributes {dimension_semantics = [#tpu.dimension_semantics<parallel>], iteration_bounds = array<i64: 1>, scalar_prefetch = 0 : i64, scratch_operands = 0 : i64, tpu.core_type = #tpu.core_type<tc>, window_params = [{transform_indices = @transform_0, window_bounds = array<i64: 2, 1024>}, {transform_indices = @transform_1, window_bounds = array<i64: 2, 1024>}]} {
    %c0 = arith.constant 0 : index
    %c0_0 = arith.constant 0 : index
    %0 = vector.load %arg1[%c0, %c0_0] : memref<2x1024xf32, #tpu.memory_space<vmem>>, vector<2x1024xf32>
    %cst = arith.constant 3.000000e+00 : f32
    %1 = vector.broadcast %cst : f32 to vector<2x1024xf32>
    %2 = arith.addf %0, %1 : vector<2x1024xf32>
    %cst_1 = arith.constant 0.166666672 : f32
    %3 = vector.broadcast %cst_1 : f32 to vector<2x1024xf32>
    %4 = arith.mulf %2, %3 : vector<2x1024xf32>
    %cst_2 = arith.constant 0.000000e+00 : f32
    %cst_3 = arith.constant 1.000000e+00 : f32
    %5 = vector.broadcast %cst_2 : f32 to vector<2x1024xf32>
    %6 = arith.maximumf %5, %4 : vector<2x1024xf32>
    %7 = vector.broadcast %cst_3 : f32 to vector<2x1024xf32>
    %8 = arith.minimumf %7, %6 : vector<2x1024xf32>
    %9 = arith.mulf %0, %8 : vector<2x1024xf32>
    %c0_4 = arith.constant 0 : index
    %c0_5 = arith.constant 0 : index
    %10 = vector.load %arg2[%c0_4, %c0_5] : memref<2x1024xf32, #tpu.memory_space<vmem>>, vector<2x1024xf32>
    tpu.vector_store %arg2[%c0_4, %c0_5], %9 {strides = array<i32>} : memref<2x1024xf32, #tpu.memory_space<vmem>>, vector<2x1024xf32>,
    return
  }
  func.func @transform_0(%arg0: i32) -> (i32, i32) {
    %c0_i32 = arith.constant 0 : i32
    %c0_i32_0 = arith.constant 0 : i32
    return %arg0, %c0_i32 : i32, i32
  }
  func.func @transform_1(%arg0: i32) -> (i32, i32) {
    %c0_i32 = arith.constant 0 : i32
    %c0_i32_0 = arith.constant 0 : i32
    return %arg0, %c0_i32 : i32, i32
  }
}

</mosaic_0001>

<llo_original>
// kernel: tpu_custom_call.1
$region0: #{tpu_custom_call.1}
  #allocation0 [shape = 'u32[]', space=smem, size = 0x4, offset = 0x4, fixed_abs, tag = 'smem constant byte address 0x4 - core index']
  #allocation1 [shape = 'u32[144,128]{1,0:T(1,128)}', space=vmem, size = 0x12000, scoped, tag = 'internal scratch']
  %s0 = inlined_call_operand.hbm [shape: f32[2,1024], index: 0, kind: input, shape index: {}]
  %s1 = inlined_call_operand.hbm [shape: f32[2,1024], index: 1, kind: output, shape index: {}]
  %s2 = sld [smem:[#allocation0]]
  $region18: #{tpu_custom_call.1} parent=0
    _
  %s4 = ssub.s32 1, %s2
  %s5 = scalar_select 0, %s4, %s2
  $region1: #{tpu_custom_call.1} parent=0
    #allocation2 [shape = 'u8[8192]{0}', space=vmem, size = 0x2000, scoped, tag = 'input window, operand 0, single buffered']
    #allocation3 [shape = 's32[1]{0}', space=sflag, size = 0x4, scoped, tag = 'scoped memory for tpu_custom_call.1']
    #allocation4 [shape = 's32[1]{0}', space=sflag, size = 0x4, scoped, tag = 'scoped memory for tpu_custom_call.1']
    #allocation5 [shape = 'u8[8192]{0}', space=vmem, size = 0x2000, scoped, tag = 'output window, operand 0, single buffered']
    %6 = vsyncpa [#allocation3], 0
    %7 = vsyncpa [#allocation4], 0
    // Predicated region
    $region2: #{tpu_custom_call.1} parent=1 // pred_check
      _
    $region3: #{tpu_custom_call.1} parent=1 // pred_check_branch
      %9 = sbr.rel (0) target = $region5
    $region4: #{tpu_custom_call.1} parent=1 // pred_region
      %s11 = ssub.s32 256, 256
      %12 = vsyncadd [#allocation3], %s11
      %s14 = sshll.u32 [#allocation2], 4
      %s15 = int_to_ptr.vmem [resolvable:$true] %s14
      %17 = dma.hbm_to_vmem [thread:$0]  %s0, 256, %s15, [#allocation3]
    $region5: #{tpu_custom_call.1} parent=1 // pred_fallthru
      _
    // Predicated region
    $region6: #{tpu_custom_call.1} parent=1 // pred_check
      _
    $region7: #{tpu_custom_call.1} parent=1 // pred_check_branch
      %19 = sbr.rel (0) target = $region9
    $region8: #{tpu_custom_call.1} parent=1 // pred_region
      %20 = dma.done [#allocation3], 256
    $region9: #{tpu_custom_call.1} parent=1 // pred_fallthru
      _
    %v21 = vld [vmem:[#allocation2] sm:$0xff]
    %v22 = vld [vmem:[#allocation2 + $0x8] sm:$0xff]
    %v23 = vadd.f32 %v21, 3.0
    %v24 = vadd.f32 %v22, 3.0
    %v25 = vmul.f32 %v23, 0.16666667
    %v26 = vmul.f32 %v24, 0.16666667
    %v27 = vmax.f32 %v25, 0.0
    %v28 = vmax.f32 %v26, 0.0
    %v29 = vmin.f32 %v27, 1.0
    %v30 = vmin.f32 %v28, 1.0
    %v31 = vmul.f32 %v21, %v29
    %v32 = vmul.f32 %v22, %v30
    %33 = vst [vmem:[#allocation5] sm:$0xff] %v31
    %34 = vst [vmem:[#allocation5 + $0x8] sm:$0xff] %v32
    // Predicated region
    $region10: #{tpu_custom_call.1} parent=1 // pred_check
      _
    $region11: #{tpu_custom_call.1} parent=1 // pred_check_branch
      %36 = sbr.rel (0) target = $region13
    $region12: #{tpu_custom_call.1} parent=1 // pred_region
      %s38 = ssub.s32 256, 256
      %39 = vsyncadd [#allocation4], %s38
      %s41 = sshll.u32 [#allocation5], 4
      %s42 = int_to_ptr.vmem [resolvable:$true] %s41
      %44 = dma.vmem_to_hbm [thread:$0]  %s42, 256, %s1, [#allocation4]
    $region13: #{tpu_custom_call.1} parent=1 // pred_fallthru
      _
    // Predicated region
    $region14: #{tpu_custom_call.1} parent=1 // pred_check
      _
    $region15: #{tpu_custom_call.1} parent=1 // pred_check_branch
      %46 = sbr.rel (0) target = $region17
    $region16: #{tpu_custom_call.1} parent=1 // pred_region
      %47 = dma.done [#allocation4], 256
    $region17: #{tpu_custom_call.1} parent=1 // pred_fallthru
      _
    %48 = vsyncpa [#allocation3], 1
    %49 = vsyncpa [#allocation4], 1

</llo_original>
